<compile_context>
chip_gen: v7x
topology: tpu7x:2x2x1
jax: 0.10.0
libtpu: 0.0.40
codegen_flags: <defaults>
</compile_context>

<pallas_src>
import jax
import jax.numpy as jnp
from jax.experimental import pallas as pl
from jax.experimental.pallas import tpu as pltpu

MATMUL_DTYPE = jnp.bfloat16   # MXU operand dtype; accumulation is always f32.


def _round_up(x, m):
    return (x + m - 1) // m * m


# ----------------------- tiled linear:  y = x @ W + b ------------------------

def _linear_kernel(x_ref, w_ref, b_ref, o_ref):
    o_ref[...] = (
        jnp.dot(x_ref[...], w_ref[...], preferred_element_type=jnp.float32)
        + b_ref[...]
    )


def linear_pallas(x, w_t, b, *, n_tile=256, o_tile=1024):
    """x: (N, K), w_t: (K, O), b: (1, O) f32  ->  (N, O) f32.

    Output-column tiles are the OUTER grid axis so each (K, o_tile) weight
    block is DMA'd once and stays resident while the row tiles sweep.
    """
    N, K = x.shape
    O = w_t.shape[1]

    n_tile = min(n_tile, _round_up(N, 8))        # sublane-aligned row tile
    o_tile = min(o_tile, _round_up(O, 128))      # lane-dense output tile
    N_p = _round_up(N, n_tile)
    O_p = _round_up(O, o_tile)

    x_p = jnp.pad(x, ((0, N_p - N), (0, 0)))
    w_p = jnp.pad(w_t, ((0, 0), (0, O_p - O)))
    b_p = jnp.pad(b.astype(jnp.float32), ((0, 0), (0, O_p - O)))

    out = pl.pallas_call(
        _linear_kernel,
        out_shape=jax.ShapeDtypeStruct((N_p, O_p), jnp.float32),
        grid_spec=pltpu.PrefetchScalarGridSpec(
            num_scalar_prefetch=0,
            grid=(O_p // o_tile, N_p // n_tile),        # columns OUTER, rows inner
            in_specs=[
                pl.BlockSpec((n_tile, K), lambda j, i: (i, 0)),
                pl.BlockSpec((K, o_tile), lambda j, i: (0, j)),  # resident per j
                pl.BlockSpec((1, o_tile), lambda j, i: (0, j)),
            ],
            out_specs=pl.BlockSpec((n_tile, o_tile), lambda j, i: (i, j)),
        ),
        compiler_params=pltpu.CompilerParams(
            dimension_semantics=("parallel", "parallel"),
            # v7x-safe scoped VMEM; v5e/v6e (128 MiB physical) could raise this
            # together with bigger tiles.
            vmem_limit_bytes=40 * 1024 * 1024,
        ),
        cost_estimate=pl.CostEstimate(
            flops=2 * N_p * K * O_p,
            transcendentals=0,
            bytes_accessed=int(N_p * K * x.dtype.itemsize
                               + K * O_p * w_t.dtype.itemsize
                               + N_p * O_p * 4),
        ),
    )(x_p, w_p, b_p)
    return out[:N, :O]


# ----------------------------- LSTM recurrence --------------------------------

def _lstm_kernel(gx_ref, whh_ref, h_out_ref, h_scr, c_scr):
    """Processes one chunk of time steps.

    gx_ref:    (Tc, Bp, 4*Hp) f32  hoisted x @ W_ih^T + (b_ih + b_hh); gates
                                   (i, f, g, o) occupy lane-aligned Hp-wide
                                   column groups (Hp % 128 == 0).
    whh_ref:   (Hp, 4*Hp)     bf16 fused recurrent weights: ONE MXU call/step.
    h_out_ref: (Tc, Bp, Hp)   f32  hidden-state slab for this chunk.
    h_scr/c_scr: (Bp, Hp)     f32  recurrent state carried across grid steps.
    """
    t_chunk = gx_ref.shape[0]
    hp = h_scr.shape[1]

    @pl.when(pl.program_id(0) == 0)
    def _():
        h_scr[...] = jnp.zeros_like(h_scr)
        c_scr[...] = jnp.zeros_like(c_scr)

    whh = whh_ref[...]                      # loaded once per chunk

    def step(tl, carry):
        h, c = carry                        # state lives in vregs, not VMEM
        # One fused (Bp,Hp) x (Hp,4Hp) dot instead of four per-gate dots.
        g = gx_ref[tl] + jnp.dot(h.astype(whh.dtype), whh,
                                 preferred_element_type=jnp.float32)
        i_g = jax.nn.sigmoid(g[:, 0 * hp:1 * hp])   # free lane-aligned slices
        f_g = jax.nn.sigmoid(g[:, 1 * hp:2 * hp])
        g_g = jnp.tanh(g[:, 2 * hp:3 * hp])
        o_g = jax.nn.sigmoid(g[:, 3 * hp:4 * hp])
        c_new = f_g * c + i_g * g_g                 # all-f32 elementwise (v5e safe)
        h_new = o_g * jnp.tanh(c_new)
        h_out_ref[tl] = h_new                       # slab stays in VMEM; DMA'd once
        return (h_new, c_new)

    h_fin, c_fin = jax.lax.fori_loop(
        0, t_chunk, step, (h_scr[...], c_scr[...]), unroll=min(4, t_chunk))
    h_scr[...] = h_fin                              # state written back once/chunk
    c_scr[...] = c_fin


def lstm_pallas(gates_x, whh_fused, *, t_chunk=32):
    """gates_x: (T, Bp, 4*Hp) f32; whh_fused: (Hp, 4*Hp). Returns (T, Bp, Hp) f32."""
    T, Bp, G = gates_x.shape
    Hp = G // 4
    t_chunk = min(t_chunk, T)
    T_p = _round_up(T, t_chunk)
    gx = jnp.pad(gates_x, ((0, T_p - T), (0, 0), (0, 0)))

    hiddens = pl.pallas_call(
        _lstm_kernel,
        out_shape=jax.ShapeDtypeStruct((T_p, Bp, Hp), jnp.float32),
        grid_spec=pltpu.PrefetchScalarGridSpec(
            num_scalar_prefetch=0,
            grid=(T_p // t_chunk,),
            in_specs=[
                pl.BlockSpec((t_chunk, Bp, G), lambda c: (c, 0, 0)),
                pl.BlockSpec((Hp, G), lambda c: (0, 0)),
            ],
            out_specs=pl.BlockSpec((t_chunk, Bp, Hp), lambda c: (c, 0, 0)),
            scratch_shapes=[
                pltpu.VMEM((Bp, Hp), jnp.float32),   # h state
                pltpu.VMEM((Bp, Hp), jnp.float32),   # c state
            ],
        ),
        compiler_params=pltpu.CompilerParams(
            dimension_semantics=("arbitrary",),      # sequential recurrence
            vmem_limit_bytes=32 * 1024 * 1024,
        ),
        cost_estimate=pl.CostEstimate(
            flops=int(T_p * (2 * Bp * Hp * 4 * Hp + 10 * Bp * Hp)),
            transcendentals=int(5 * T_p * Bp * Hp),
            bytes_accessed=int(T_p * Bp * G * 4
                               + Hp * G * whh_fused.dtype.itemsize
                               + T_p * Bp * Hp * 4),
        ),
    )(gx, whh_fused)
    return hiddens[:T]


# ------------------------------- parameters -----------------------------------

def init_encoder_params(key, feat_dim, embed_size):
    kw, kb = jax.random.split(key)
    return {
        "w_embed": 0.02 * jax.random.normal(kw, (embed_size, feat_dim), jnp.float32),
        "b_embed": 0.02 * jax.random.normal(kb, (embed_size,), jnp.float32),
    }


def init_decoder_params(key, embed_size, hidden_size, vocab_size):
    ks = jax.random.split(key, 7)
    s = 0.1
    return {
        "embedding": s * jax.random.normal(ks[0], (vocab_size, embed_size), jnp.float32),
        "w_ih": s * jax.random.normal(ks[1], (4 * hidden_size, embed_size), jnp.float32),
        "w_hh": s * jax.random.normal(ks[2], (4 * hidden_size, hidden_size), jnp.float32),
        "b_ih": s * jax.random.normal(ks[3], (4 * hidden_size,), jnp.float32),
        "b_hh": s * jax.random.normal(ks[4], (4 * hidden_size,), jnp.float32),
        "w_lin": s * jax.random.normal(ks[5], (vocab_size, hidden_size), jnp.float32),
        "b_lin": s * jax.random.normal(ks[6], (vocab_size,), jnp.float32),
    }


# --------------------------------- forward ------------------------------------

@jax.jit
def encoder_cnn_forward(params, pooled_features):
    """EncoderCNN.forward given the pooled backbone output (B, 2048) -> (B, E).

    TODO(synk): the frozen pretrained ResNet-50 backbone itself cannot be
    reproduced in-script (no pretrained weights / network); its pooled output
    `resnet(images).view(B, -1)` is taken as the kernel input.
    """
    w_t = params["w_embed"].T.astype(MATMUL_DTYPE)          # (feat, E)
    b = params["b_embed"].reshape(1, -1)
    return linear_pallas(pooled_features.astype(MATMUL_DTYPE), w_t, b)


@jax.jit
def decoder_rnn_forward(params, features, captions):
    """DecoderRNN.forward: features (B,E) f32, captions (B,Tcap) i32 -> (B,Tcap,V)."""
    B, E = features.shape
    H = params["w_hh"].shape[1]
    V = params["w_lin"].shape[0]
    Hp = _round_up(H, 128)          # lane-dense hidden / gate groups

    emb = jnp.take(params["embedding"], captions[:, :-1], axis=0)     # (B, T-1, E)
    x = jnp.concatenate([features[:, None, :], emb], axis=1)          # (B, T, E)
    T = x.shape[1]

    # Pad batch to a full sublane (8) and go time-major.
    Bp = _round_up(B, 8)
    x = jnp.pad(x, ((0, Bp - B), (0, 0), (0, 0)))
    x_tbe = jnp.transpose(x, (1, 0, 2))                               # (T, Bp, E)

    # Fused-gate, lane-padded weight layouts.  Zero padding keeps the padded
    # hidden components exactly zero, so semantics are unchanged.
    # W_ih (4H, E) -> (E, 4*Hp); gate g occupies columns [g*Hp, (g+1)*Hp).
    wih = jnp.pad(params["w_ih"].reshape(4, H, E), ((0, 0), (0, Hp - H), (0, 0)))
    wih_fused_t = jnp.transpose(wih, (2, 0, 1)).reshape(E, 4 * Hp).astype(MATMUL_DTYPE)
    bias = jnp.pad((params["b_ih"] + params["b_hh"]).reshape(4, H),
                   ((0, 0), (0, Hp - H))).reshape(1, 4 * Hp)
    # W_hh (4H, H) -> single fused (Hp, 4*Hp) operand.
    whh = jnp.pad(params["w_hh"].reshape(4, H, H),
                  ((0, 0), (0, Hp - H), (0, Hp - H)))
    whh_fused = jnp.transpose(whh, (2, 0, 1)).reshape(Hp, 4 * Hp).astype(MATMUL_DTYPE)

    # Hoisted input projection: one big matmul covers every time step; the
    # result is consumed as (T, Bp, 4*Hp) with NO relayout/transpose.
    gx = linear_pallas(
        x_tbe.reshape(T * Bp, E).astype(MATMUL_DTYPE), wih_fused_t, bias
    ).reshape(T, Bp, 4 * Hp)

    hiddens = lstm_pallas(gx, whh_fused)                              # (T, Bp, Hp)

    # Transpose the *small* hidden tensor to batch-major, then one tiled vocab
    # projection straight into (B*T, V) — the large logits tensor is never
    # transposed.
    h_bt = jnp.transpose(hiddens[:, :B], (1, 0, 2)).reshape(B * T, Hp)
    wlin_t = jnp.pad(params["w_lin"].T, ((0, Hp - H), (0, 0))).astype(MATMUL_DTYPE)
    blin = params["b_lin"].reshape(1, V)
    logits = linear_pallas(h_bt.astype(MATMUL_DTYPE), wlin_t, blin)   # (B*T, V)
    return logits.reshape(B, T, V)


# ------------------------------- references -----------------------------------

def encoder_reference(params, pooled, matmul_dtype=jnp.float32):
    c = lambda a: a.astype(matmul_dtype)
    return (jnp.dot(c(pooled), c(params["w_embed"].T),
                    preferred_element_type=jnp.float32) + params["b_embed"])


def decoder_reference(params, features, captions, matmul_dtype=jnp.float32):
    c = lambda a: a.astype(matmul_dtype)
    emb = jnp.take(params["embedding"], captions[:, :-1], axis=0)
    x = jnp.concatenate([features[:, None, :], emb], axis=1)          # (B, T, E)
    B, T, _ = x.shape
    H = params["w_hh"].shape[1]
    wih_t = c(params["w_ih"].T)
    whh_t = c(params["w_hh"].T)
    bias = params["b_ih"] + params["b_hh"]
    gx = jnp.dot(c(x), wih_t, preferred_element_type=jnp.float32) + bias

    def step(carry, gx_t):
        h, cs = carry
        g = gx_t + jnp.dot(c(h), whh_t, preferred_element_type=jnp.float32)
        i = jax.nn.sigmoid(g[:, :H])
        f = jax.nn.sigmoid(g[:, H:2 * H])
        gg = jnp.tanh(g[:, 2 * H:3 * H])
        o = jax.nn.sigmoid(g[:, 3 * H:])
        cs = f * cs + i * gg
        h = o * jnp.tanh(cs)
        return (h, cs), h

    h0 = jnp.zeros((B, H), jnp.float32)
    (_, _), hs = jax.lax.scan(step, (h0, h0), jnp.transpose(gx, (1, 0, 2)))
    hiddens = jnp.transpose(hs, (1, 0, 2))                            # (B, T, H)
    return (jnp.dot(c(hiddens), c(params["w_lin"].T),
                    preferred_element_type=jnp.float32) + params["b_lin"])


# ----------------------------------- main --------------------------------------

if __name__ == "__main__":
    embed_size, hidden_size, vocab_size = 16, 32, 40
    resnet_feat_dim = 2048            # resnet50 fc.in_features
    batch, cap_len = 2, 8

    key = jax.random.PRNGKey(0)
    k_enc, k_dec, k_img, k_cap = jax.random.split(key, 4)
    enc_params = init_encoder_params(k_enc, resnet_feat_dim, embed_size)
    dec_params = init_decoder_params(k_dec, embed_size, hidden_size, vocab_size)

    # Stand-in for resnet(images).view(B, -1); see TODO(synk) above.
    pooled = jax.random.normal(k_img, (batch, resnet_feat_dim), jnp.float32)
    captions = jax.random.randint(k_cap, (batch, cap_len), 0, vocab_size, jnp.int32)

    features = encoder_cnn_forward(enc_params, pooled)                # (B, E)
    logits = decoder_rnn_forward(dec_params, features, captions)      # (B, T, V)
    jax.block_until_ready((features, logits))

    assert features.shape == (batch, embed_size), features.shape
    assert logits.shape == (batch, cap_len, vocab_size), logits.shape

    feat_ref = encoder_reference(enc_params, pooled, matmul_dtype=MATMUL_DTYPE)
    assert jnp.allclose(features, feat_ref, atol=5e-3, rtol=5e-3), "encoder mismatch"

    ref_matched = decoder_reference(dec_params, features, captions,
                                    matmul_dtype=MATMUL_DTYPE)
    ref_f32 = decoder_reference(dec_params, features, captions,
                                matmul_dtype=jnp.float32)
    assert jnp.allclose(logits, ref_matched, atol=5e-3, rtol=5e-3), \
        "decoder mismatch (matched precision)"
    assert jnp.allclose(logits, ref_f32, atol=5e-2, rtol=5e-2), \
        "decoder mismatch (f32 semantics)"

    print("KERNEL_OK")
</pallas_src>

<mosaic_0001>
module attributes {stable_mosaic.version = 11 : i64} {
  func.func @_linear_kernel(%arg0: i32, %arg1: i32, %arg2: memref<8x2048xbf16, #tpu.memory_space<vmem>>, %arg3: memref<2048x128xbf16, #tpu.memory_space<vmem>>, %arg4: memref<1x128xf32, #tpu.memory_space<vmem>>, %arg5: memref<8x128xf32, #tpu.memory_space<vmem>>) attributes {dimension_semantics = [#tpu.dimension_semantics<parallel>, #tpu.dimension_semantics<parallel>], iteration_bounds = array<i64: 1, 1>, scalar_prefetch = 0 : i64, scratch_operands = 0 : i64, tpu.core_type = #tpu.core_type<tc>, window_params = [{transform_indices = @transform_0, window_bounds = array<i64: 8, 2048>}, {transform_indices = @transform_1, window_bounds = array<i64: 2048, 128>}, {transform_indices = @transform_2, window_bounds = array<i64: 1, 128>}, {transform_indices = @transform_3, window_bounds = array<i64: 8, 128>}]} {
    %c0 = arith.constant 0 : index
    %c0_0 = arith.constant 0 : index
    %0 = vector.load %arg2[%c0, %c0_0] : memref<8x2048xbf16, #tpu.memory_space<vmem>>, vector<8x2048xbf16>
    %c0_1 = arith.constant 0 : index
    %c0_2 = arith.constant 0 : index
    %1 = vector.load %arg3[%c0_1, %c0_2] : memref<2048x128xbf16, #tpu.memory_space<vmem>>, vector<2048x128xbf16>
    %cst = arith.constant dense<0.000000e+00> : vector<8x128xf32>
    %2 = tpu.matmul %0, %1, %cst {dimension_numbers = #tpu.dot_dimension_numbers<[1], [0], [0], [1], [0, 0, 1, 1], [], []>} : vector<8x2048xbf16>, vector<2048x128xbf16>, vector<8x128xf32> -> vector<8x128xf32>
    %c0_3 = arith.constant 0 : index
    %c0_4 = arith.constant 0 : index
    %3 = vector.load %arg4[%c0_3, %c0_4] : memref<1x128xf32, #tpu.memory_space<vmem>>, vector<1x128xf32>
    %4 = vector.broadcast %3 : vector<1x128xf32> to vector<8x128xf32>
    %5 = arith.addf %2, %4 : vector<8x128xf32>
    %c0_5 = arith.constant 0 : index
    %c0_6 = arith.constant 0 : index
    %6 = vector.load %arg5[%c0_5, %c0_6] : memref<8x128xf32, #tpu.memory_space<vmem>>, vector<8x128xf32>
    tpu.vector_store %arg5[%c0_5, %c0_6], %5 {strides = array<i32>} : memref<8x128xf32, #tpu.memory_space<vmem>>, vector<8x128xf32>,
    return
  }
  func.func @transform_0(%arg0: i32, %arg1: i32) -> (i32, i32) {
    %c0_i32 = arith.constant 0 : i32
    %c0_i32_0 = arith.constant 0 : i32
    return %arg1, %c0_i32 : i32, i32
  }
  func.func @transform_1(%arg0: i32, %arg1: i32) -> (i32, i32) {
    %c0_i32 = arith.constant 0 : i32
    %c0_i32_0 = arith.constant 0 : i32
    return %c0_i32, %arg0 : i32, i32
  }
  func.func @transform_2(%arg0: i32, %arg1: i32) -> (i32, i32) {
    %c0_i32 = arith.constant 0 : i32
    %c0_i32_0 = arith.constant 0 : i32
    return %c0_i32, %arg0 : i32, i32
  }
  func.func @transform_3(%arg0: i32, %arg1: i32) -> (i32, i32) {
    %c0_i32 = arith.constant 0 : i32
    return %arg1, %arg0 : i32, i32
  }
}

</mosaic_0001>

<llo_original>
// kernel: encoder_cnn_forward.1
$region0: #{encoder_cnn_forward.1}
  #allocation0 [shape = 'u32[]', space=smem, size = 0x4, offset = 0x4, fixed_abs, tag = 'smem constant byte address 0x4 - core index']
  #allocation1 [shape = 'u32[144,128]{1,0:T(1,128)}', space=vmem, size = 0x12000, scoped, tag = 'internal scratch']
  %s0 = inlined_call_operand.vmem [shape: bf16[8,2048], index: 0, kind: input, shape index: {}]
  %s1 = inlined_call_operand.vmem [shape: bf16[2048,128], index: 1, kind: input, shape index: {}]
  %s2 = inlined_call_operand.vmem [shape: f32[1,128], index: 2, kind: input, shape index: {}]
  %s3 = inlined_call_operand.vmem [shape: f32[8,128], index: 3, kind: output, shape index: {}]
  %s4 = sld [smem:[#allocation0]]
  $region22: #{encoder_cnn_forward.1} parent=0
    _
  %s6 = ssub.s32 1, %s4
  %s7 = scalar_select 0, %s6, %s4
  // Predicated region
  $region2: #{encoder_cnn_forward.1} parent=0 // pred_check
    _
  $region3: #{encoder_cnn_forward.1} parent=0 // pred_check_branch
    %9 = sbr.rel (0) target = $region5
  $region4: #{encoder_cnn_forward.1} parent=0 // pred_region
    _
  $region5: #{encoder_cnn_forward.1} parent=0 // pred_fallthru
    _
  // Predicated region
  $region6: #{encoder_cnn_forward.1} parent=0 // pred_check
    _
  $region7: #{encoder_cnn_forward.1} parent=0 // pred_check_branch
    %11 = sbr.rel (0) target = $region9
  $region8: #{encoder_cnn_forward.1} parent=0 // pred_region
    _
  $region9: #{encoder_cnn_forward.1} parent=0 // pred_fallthru
    _
  // Predicated region
  $region10: #{encoder_cnn_forward.1} parent=0 // pred_check
    _
  $region11: #{encoder_cnn_forward.1} parent=0 // pred_check_branch
    %13 = sbr.rel (0) target = $region13
  $region12: #{encoder_cnn_forward.1} parent=0 // pred_region
    _
  $region13: #{encoder_cnn_forward.1} parent=0 // pred_fallthru
    _
  %v15 = vld [vmem:[%s0] sm:$0xff]
  %v16 = vld [vmem:[%s0 + $0x8] sm:$0xff]
  %v17 = vld [vmem:[%s0 + $0x10] sm:$0xff]
  %v18 = vld [vmem:[%s0 + $0x18] sm:$0xff]
  %v19 = vld [vmem:[%s0 + $0x20] sm:$0xff]
  %v20 = vld [vmem:[%s0 + $0x28] sm:$0xff]
  %v21 = vld [vmem:[%s0 + $0x30] sm:$0xff]
  %v22 = vld [vmem:[%s0 + $0x38] sm:$0xff]
  %v23 = vld [vmem:[%s1] sm:$0xf]
  %v24 = vld [vmem:[%s1 + $0x4] sm:$0xf]
  %v25 = vld [vmem:[%s1 + $0x8] sm:$0xf]
  %v26 = vld [vmem:[%s1 + $0xc] sm:$0xf]
  %v27 = vld [vmem:[%s1 + $0x10] sm:$0xf]
  %v28 = vld [vmem:[%s1 + $0x14] sm:$0xf]
  %v29 = vld [vmem:[%s1 + $0x18] sm:$0xf]
  %v30 = vld [vmem:[%s1 + $0x1c] sm:$0xf]
  %v31 = vld [vmem:[%s1 + $0x20] sm:$0xf]
  %v32 = vld [vmem:[%s1 + $0x24] sm:$0xf]
  %v33 = vld [vmem:[%s1 + $0x28] sm:$0xf]
  %v34 = vld [vmem:[%s1 + $0x2c] sm:$0xf]
  %v35 = vld [vmem:[%s1 + $0x30] sm:$0xf]
  %v36 = vld [vmem:[%s1 + $0x34] sm:$0xf]
  %v37 = vld [vmem:[%s1 + $0x38] sm:$0xf]
  %v38 = vld [vmem:[%s1 + $0x3c] sm:$0xf]
  %v39 = vld [vmem:[%s1 + $0x40] sm:$0xf]
  %v40 = vld [vmem:[%s1 + $0x44] sm:$0xf]
  %v41 = vld [vmem:[%s1 + $0x48] sm:$0xf]
  %v42 = vld [vmem:[%s1 + $0x4c] sm:$0xf]
  %v43 = vld [vmem:[%s1 + $0x50] sm:$0xf]
  %v44 = vld [vmem:[%s1 + $0x54] sm:$0xf]
  %v45 = vld [vmem:[%s1 + $0x58] sm:$0xf]
  %v46 = vld [vmem:[%s1 + $0x5c] sm:$0xf]
  %v47 = vld [vmem:[%s1 + $0x60] sm:$0xf]
  %v48 = vld [vmem:[%s1 + $0x64] sm:$0xf]
  %v49 = vld [vmem:[%s1 + $0x68] sm:$0xf]
  %v50 = vld [vmem:[%s1 + $0x6c] sm:$0xf]
  %v51 = vld [vmem:[%s1 + $0x70] sm:$0xf]
  %v52 = vld [vmem:[%s1 + $0x74] sm:$0xf]
  %v53 = vld [vmem:[%s1 + $0x78] sm:$0xf]
  %v54 = vld [vmem:[%s1 + $0x7c] sm:$0xf]
  %v55 = vld [vmem:[%s1 + $0x80] sm:$0xf]
  %v56 = vld [vmem:[%s1 + $0x84] sm:$0xf]
  %v57 = vld [vmem:[%s1 + $0x88] sm:$0xf]
  %v58 = vld [vmem:[%s1 + $0x8c] sm:$0xf]
  %v59 = vld [vmem:[%s1 + $0x90] sm:$0xf]
  %v60 = vld [vmem:[%s1 + $0x94] sm:$0xf]
  %v61 = vld [vmem:[%s1 + $0x98] sm:$0xf]
  %v62 = vld [vmem:[%s1 + $0x9c] sm:$0xf]
  %v63 = vld [vmem:[%s1 + $0xa0] sm:$0xf]
  %v64 = vld [vmem:[%s1 + $0xa4] sm:$0xf]
  %v65 = vld [vmem:[%s1 + $0xa8] sm:$0xf]
  %v66 = vld [vmem:[%s1 + $0xac] sm:$0xf]
  %v67 = vld [vmem:[%s1 + $0xb0] sm:$0xf]
  %v68 = vld [vmem:[%s1 + $0xb4] sm:$0xf]
  %v69 = vld [vmem:[%s1 + $0xb8] sm:$0xf]
  %v70 = vld [vmem:[%s1 + $0xbc] sm:$0xf]
  %v71 = vld [vmem:[%s1 + $0xc0] sm:$0xf]
  %v72 = vld [vmem:[%s1 + $0xc4] sm:$0xf]
  %v73 = vld [vmem:[%s1 + $0xc8] sm:$0xf]
  %v74 = vld [vmem:[%s1 + $0xcc] sm:$0xf]
  %v75 = vld [vmem:[%s1 + $0xd0] sm:$0xf]
  %v76 = vld [vmem:[%s1 + $0xd4] sm:$0xf]
  %v77 = vld [vmem:[%s1 + $0xd8] sm:$0xf]
  %v78 = vld [vmem:[%s1 + $0xdc] sm:$0xf]
  %v79 = vld [vmem:[%s1 + $0xe0] sm:$0xf]
  %v80 = vld [vmem:[%s1 + $0xe4] sm:$0xf]
  %v81 = vld [vmem:[%s1 + $0xe8] sm:$0xf]
  %v82 = vld [vmem:[%s1 + $0xec] sm:$0xf]
  %v83 = vld [vmem:[%s1 + $0xf0] sm:$0xf]
  %v84 = vld [vmem:[%s1 + $0xf4] sm:$0xf]
  %v85 = vld [vmem:[%s1 + $0xf8] sm:$0xf]
  %v86 = vld [vmem:[%s1 + $0xfc] sm:$0xf]
  %v87 = vld [vmem:[%s1 + $0x100] sm:$0xf]
  %v88 = vld [vmem:[%s1 + $0x104] sm:$0xf]
  %v89 = vld [vmem:[%s1 + $0x108] sm:$0xf]
  %v90 = vld [vmem:[%s1 + $0x10c] sm:$0xf]
  %v91 = vld [vmem:[%s1 + $0x110] sm:$0xf]
  %v92 = vld [vmem:[%s1 + $0x114] sm:$0xf]
  %v93 = vld [vmem:[%s1 + $0x118] sm:$0xf]
  %v94 = vld [vmem:[%s1 + $0x11c] sm:$0xf]
  %v95 = vld [vmem:[%s1 + $0x120] sm:$0xf]
  %v96 = vld [vmem:[%s1 + $0x124] sm:$0xf]
  %v97 = vld [vmem:[%s1 + $0x128] sm:$0xf]
  %v98 = vld [vmem:[%s1 + $0x12c] sm:$0xf]
  %v99 = vld [vmem:[%s1 + $0x130] sm:$0xf]
  %v100 = vld [vmem:[%s1 + $0x134] sm:$0xf]
  %v101 = vld [vmem:[%s1 + $0x138] sm:$0xf]
  %v102 = vld [vmem:[%s1 + $0x13c] sm:$0xf]
  %v103 = vld [vmem:[%s1 + $0x140] sm:$0xf]
  %v104 = vld [vmem:[%s1 + $0x144] sm:$0xf]
  %v105 = vld [vmem:[%s1 + $0x148] sm:$0xf]
  %v106 = vld [vmem:[%s1 + $0x14c] sm:$0xf]
  %v107 = vld [vmem:[%s1 + $0x150] sm:$0xf]
  %v108 = vld [vmem:[%s1 + $0x154] sm:$0xf]
  %v109 = vld [vmem:[%s1 + $0x158] sm:$0xf]
  %v110 = vld [vmem:[%s1 + $0x15c] sm:$0xf]
  %v111 = vld [vmem:[%s1 + $0x160] sm:$0xf]
  %v112 = vld [vmem:[%s1 + $0x164] sm:$0xf]
  %v113 = vld [vmem:[%s1 + $0x168] sm:$0xf]
  %v114 = vld [vmem:[%s1 + $0x16c] sm:$0xf]
  %v115 = vld [vmem:[%s1 + $0x170] sm:$0xf]
  %v116 = vld [vmem:[%s1 + $0x174] sm:$0xf]
  %v117 = vld [vmem:[%s1 + $0x178] sm:$0xf]
  %v118 = vld [vmem:[%s1 + $0x17c] sm:$0xf]
  %v119 = vld [vmem:[%s1 + $0x180] sm:$0xf]
  %v120 = vld [vmem:[%s1 + $0x184] sm:$0xf]
  %v121 = vld [vmem:[%s1 + $0x188] sm:$0xf]
  %v122 = vld [vmem:[%s1 + $0x18c] sm:$0xf]
  %v123 = vld [vmem:[%s1 + $0x190] sm:$0xf]
  %v124 = vld [vmem:[%s1 + $0x194] sm:$0xf]
  %v125 = vld [vmem:[%s1 + $0x198] sm:$0xf]
  %v126 = vld [vmem:[%s1 + $0x19c] sm:$0xf]
  %v127 = vld [vmem:[%s1 + $0x1a0] sm:$0xf]
  %v128 = vld [vmem:[%s1 + $0x1a4] sm:$0xf]
  %v129 = vld [vmem:[%s1 + $0x1a8] sm:$0xf]
  %v130 = vld [vmem:[%s1 + $0x1ac] sm:$0xf]
  %v131 = vld [vmem:[%s1 + $0x1b0] sm:$0xf]
  %v132 = vld [vmem:[%s1 + $0x1b4] sm:$0xf]
  %v133 = vld [vmem:[%s1 + $0x1b8] sm:$0xf]
  %v134 = vld [vmem:[%s1 + $0x1bc] sm:$0xf]
  %v135 = vld [vmem:[%s1 + $0x1c0] sm:$0xf]
  %v136 = vld [vmem:[%s1 + $0x1c4] sm:$0xf]
  %v137 = vld [vmem:[%s1 + $0x1c8] sm:$0xf]
  %v138 = vld [vmem:[%s1 + $0x1cc] sm:$0xf]
  %v139 = vld [vmem:[%s1 + $0x1d0] sm:$0xf]
  %v140 = vld [vmem:[%s1 + $0x1d4] sm:$0xf]
  %v141 = vld [vmem:[%s1 + $0x1d8] sm:$0xf]
  %v142 = vld [vmem:[%s1 + $0x1dc] sm:$0xf]
  %v143 = vld [vmem:[%s1 + $0x1e0] sm:$0xf]
  %v144 = vld [vmem:[%s1 + $0x1e4] sm:$0xf]
  %v145 = vld [vmem:[%s1 + $0x1e8] sm:$0xf]
  %v146 = vld [vmem:[%s1 + $0x1ec] sm:$0xf]
  %v147 = vld [vmem:[%s1 + $0x1f0] sm:$0xf]
  %v148 = vld [vmem:[%s1 + $0x1f4] sm:$0xf]
  %v149 = vld [vmem:[%s1 + $0x1f8] sm:$0xf]
  %v150 = vld [vmem:[%s1 + $0x1fc] sm:$0xf]
  %v151 = vld [vmem:[%s1 + $0x200] sm:$0xf]
  %v152 = vld [vmem:[%s1 + $0x204] sm:$0xf]
  %v153 = vld [vmem:[%s1 + $0x208] sm:$0xf]
  %v154 = vld [vmem:[%s1 + $0x20c] sm:$0xf]
  %v155 = vld [vmem:[%s1 + $0x210] sm:$0xf]
  %v156 = vld [vmem:[%s1 + $0x214] sm:$0xf]
  %v157 = vld [vmem:[%s1 + $0x218] sm:$0xf]
  %v158 = vld [vmem:[%s1 + $0x21c] sm:$0xf]
  %v159 = vld [vmem:[%s1 + $0x220] sm:$0xf]
  %v160 = vld [vmem:[%s1 + $0x224] sm:$0xf]
  %v161 = vld [vmem:[%s1 + $0x228] sm:$0xf]
  %v162 = vld [vmem:[%s1 + $0x22c] sm:$0xf]
  %v163 = vld [vmem:[%s1 + $0x230] sm:$0xf]
  %v164 = vld [vmem:[%s1 + $0x234] sm:$0xf]
  %v165 = vld [vmem:[%s1 + $0x238] sm:$0xf]
  %v166 = vld [vmem:[%s1 + $0x23c] sm:$0xf]
  %v167 = vld [vmem:[%s1 + $0x240] sm:$0xf]
  %v168 = vld [vmem:[%s1 + $0x244] sm:$0xf]
  %v169 = vld [vmem:[%s1 + $0x248] sm:$0xf]
  %v170 = vld [vmem:[%s1 + $0x24c] sm:$0xf]
  %v171 = vld [vmem:[%s1 + $0x250] sm:$0xf]
  %v172 = vld [vmem:[%s1 + $0x254] sm:$0xf]
  %v173 = vld [vmem:[%s1 + $0x258] sm:$0xf]
  %v174 = vld [vmem:[%s1 + $0x25c] sm:$0xf]
  %v175 = vld [vmem:[%s1 + $0x260] sm:$0xf]
  %v176 = vld [vmem:[%s1 + $0x264] sm:$0xf]
  %v177 = vld [vmem:[%s1 + $0x268] sm:$0xf]
  %v178 = vld [vmem:[%s1 + $0x26c] sm:$0xf]
  %v179 = vld [vmem:[%s1 + $0x270] sm:$0xf]
  %v180 = vld [vmem:[%s1 + $0x274] sm:$0xf]
  %v181 = vld [vmem:[%s1 + $0x278] sm:$0xf]
  %v182 = vld [vmem:[%s1 + $0x27c] sm:$0xf]
  %v183 = vld [vmem:[%s1 + $0x280] sm:$0xf]
  %v184 = vld [vmem:[%s1 + $0x284] sm:$0xf]
  %v185 = vld [vmem:[%s1 + $0x288] sm:$0xf]
  %v186 = vld [vmem:[%s1 + $0x28c] sm:$0xf]
  %v187 = vld [vmem:[%s1 + $0x290] sm:$0xf]
  %v188 = vld [vmem:[%s1 + $0x294] sm:$0xf]
  %v189 = vld [vmem:[%s1 + $0x298] sm:$0xf]
  %v190 = vld [vmem:[%s1 + $0x29c] sm:$0xf]
  %v191 = vld [vmem:[%s1 + $0x2a0] sm:$0xf]
  %v192 = vld [vmem:[%s1 + $0x2a4] sm:$0xf]
  %v193 = vld [vmem:[%s1 + $0x2a8] sm:$0xf]
  %v194 = vld [vmem:[%s1 + $0x2ac] sm:$0xf]
  %v195 = vld [vmem:[%s1 + $0x2b0] sm:$0xf]
  %v196 = vld [vmem:[%s1 + $0x2b4] sm:$0xf]
  %v197 = vld [vmem:[%s1 + $0x2b8] sm:$0xf]
  %v198 = vld [vmem:[%s1 + $0x2bc] sm:$0xf]
  %v199 = vld [vmem:[%s1 + $0x2c0] sm:$0xf]
  %v200 = vld [vmem:[%s1 + $0x2c4] sm:$0xf]
  %v201 = vld [vmem:[%s1 + $0x2c8] sm:$0xf]
  %v202 = vld [vmem:[%s1 + $0x2cc] sm:$0xf]
  %v203 = vld [vmem:[%s1 + $0x2d0] sm:$0xf]
  %v204 = vld [vmem:[%s1 + $0x2d4] sm:$0xf]
  %v205 = vld [vmem:[%s1 + $0x2d8] sm:$0xf]
  %v206 = vld [vmem:[%s1 + $0x2dc] sm:$0xf]
  %v207 = vld [vmem:[%s1 + $0x2e0] sm:$0xf]
  %v208 = vld [vmem:[%s1 + $0x2e4] sm:$0xf]
  %v209 = vld [vmem:[%s1 + $0x2e8] sm:$0xf]
  %v210 = vld [vmem:[%s1 + $0x2ec] sm:$0xf]
  %v211 = vld [vmem:[%s1 + $0x2f0] sm:$0xf]
  %v212 = vld [vmem:[%s1 + $0x2f4] sm:$0xf]
  %v213 = vld [vmem:[%s1 + $0x2f8] sm:$0xf]
  %v214 = vld [vmem:[%s1 + $0x2fc] sm:$0xf]
  %v215 = vld [vmem:[%s1 + $0x300] sm:$0xf]
  %v216 = vld [vmem:[%s1 + $0x304] sm:$0xf]
  %v217 = vld [vmem:[%s1 + $0x308] sm:$0xf]
  %v218 = vld [vmem:[%s1 + $0x30c] sm:$0xf]
  %v219 = vld [vmem:[%s1 + $0x310] sm:$0xf]
  %v220 = vld [vmem:[%s1 + $0x314] sm:$0xf]
  %v221 = vld [vmem:[%s1 + $0x318] sm:$0xf]
  %v222 = vld [vmem:[%s1 + $0x31c] sm:$0xf]
  %v223 = vld [vmem:[%s1 + $0x320] sm:$0xf]
  %v224 = vld [vmem:[%s1 + $0x324] sm:$0xf]
  %v225 = vld [vmem:[%s1 + $0x328] sm:$0xf]
  %v226 = vld [vmem:[%s1 + $0x32c] sm:$0xf]
  %v227 = vld [vmem:[%s1 + $0x330] sm:$0xf]
  %v228 = vld [vmem:[%s1 + $0x334] sm:$0xf]
  %v229 = vld [vmem:[%s1 + $0x338] sm:$0xf]
  %v230 = vld [vmem:[%s1 + $0x33c] sm:$0xf]
  %v231 = vld [vmem:[%s1 + $0x340] sm:$0xf]
  %v232 = vld [vmem:[%s1 + $0x344] sm:$0xf]
  %v233 = vld [vmem:[%s1 + $0x348] sm:$0xf]
  %v234 = vld [vmem:[%s1 + $0x34c] sm:$0xf]
  %v235 = vld [vmem:[%s1 + $0x350] sm:$0xf]
  %v236 = vld [vmem:[%s1 + $0x354] sm:$0xf]
  %v237 = vld [vmem:[%s1 + $0x358] sm:$0xf]
  %v238 = vld [vmem:[%s1 + $0x35c] sm:$0xf]
  %v239 = vld [vmem:[%s1 + $0x360] sm:$0xf]
  %v240 = vld [vmem:[%s1 + $0x364] sm:$0xf]
  %v241 = vld [vmem:[%s1 + $0x368] sm:$0xf]
  %v242 = vld [vmem:[%s1 + $0x36c] sm:$0xf]
  %v243 = vld [vmem:[%s1 + $0x370] sm:$0xf]
  %v244 = vld [vmem:[%s1 + $0x374] sm:$0xf]
  %v245 = vld [vmem:[%s1 + $0x378] sm:$0xf]
  %v246 = vld [vmem:[%s1 + $0x37c] sm:$0xf]
  %v247 = vld [vmem:[%s1 + $0x380] sm:$0xf]
  %v248 = vld [vmem:[%s1 + $0x384] sm:$0xf]
  %v249 = vld [vmem:[%s1 + $0x388] sm:$0xf]
  %v250 = vld [vmem:[%s1 + $0x38c] sm:$0xf]
  %v251 = vld [vmem:[%s1 + $0x390] sm:$0xf]
  %v252 = vld [vmem:[%s1 + $0x394] sm:$0xf]
  %v253 = vld [vmem:[%s1 + $0x398] sm:$0xf]
  %v254 = vld [vmem:[%s1 + $0x39c] sm:$0xf]
  %v255 = vld [vmem:[%s1 + $0x3a0] sm:$0xf]
  %v256 = vld [vmem:[%s1 + $0x3a4] sm:$0xf]
  %v257 = vld [vmem:[%s1 + $0x3a8] sm:$0xf]
  %v258 = vld [vmem:[%s1 + $0x3ac] sm:$0xf]
  %v259 = vld [vmem:[%s1 + $0x3b0] sm:$0xf]
  %v260 = vld [vmem:[%s1 + $0x3b4] sm:$0xf]
  %v261 = vld [vmem:[%s1 + $0x3b8] sm:$0xf]
  %v262 = vld [vmem:[%s1 + $0x3bc] sm:$0xf]
  %v263 = vld [vmem:[%s1 + $0x3c0] sm:$0xf]
  %v264 = vld [vmem:[%s1 + $0x3c4] sm:$0xf]
  %v265 = vld [vmem:[%s1 + $0x3c8] sm:$0xf]
  %v266 = vld [vmem:[%s1 + $0x3cc] sm:$0xf]
  %v267 = vld [vmem:[%s1 + $0x3d0] sm:$0xf]
  %v268 = vld [vmem:[%s1 + $0x3d4] sm:$0xf]
  %v269 = vld [vmem:[%s1 + $0x3d8] sm:$0xf]
  %v270 = vld [vmem:[%s1 + $0x3dc] sm:$0xf]
  %v271 = vld [vmem:[%s1 + $0x3e0] sm:$0xf]
  %v272 = vld [vmem:[%s1 + $0x3e4] sm:$0xf]
  %v273 = vld [vmem:[%s1 + $0x3e8] sm:$0xf]
  %v274 = vld [vmem:[%s1 + $0x3ec] sm:$0xf]
  %v275 = vld [vmem:[%s1 + $0x3f0] sm:$0xf]
  %v276 = vld [vmem:[%s1 + $0x3f4] sm:$0xf]
  %v277 = vld [vmem:[%s1 + $0x3f8] sm:$0xf]
  %v278 = vld [vmem:[%s1 + $0x3fc] sm:$0xf]
  %v279 = vld [vmem:[%s2] sm:$0x1]
  %v281 = vlaneseq
  %v282 = vshrl.u32 %v281, 7
  %v283 = vsub.s32 0, %v282
  %v284 = vrot.slane %v279, %v283
  %v294 = vunpack.c.l.b16 %v15
  %v295 = vunpack.c.h.b16 %v15
  %v296 = vunpack.c.l.b16 %v16
  %v297 = vunpack.c.h.b16 %v16
  %v298 = vunpack.c.l.b16 %v17
  %v299 = vunpack.c.h.b16 %v17
  %v300 = vunpack.c.l.b16 %v18
  %v301 = vunpack.c.h.b16 %v18
  %v302 = vunpack.c.l.b16 %v19
  %v303 = vunpack.c.h.b16 %v19
  %v304 = vunpack.c.l.b16 %v20
  %v305 = vunpack.c.h.b16 %v20
  %v306 = vunpack.c.l.b16 %v21
  %v307 = vunpack.c.h.b16 %v21
  %v308 = vunpack.c.l.b16 %v22
  %v309 = vunpack.c.h.b16 %v22
  %v310 = vpack.c.b16 %v294, %v294
  %v311 = vpack.c.b16 %v295, %v295
  %v312 = vpack.c.b16 %v296, %v296
  %v313 = vpack.c.b16 %v297, %v297
  %v314 = vpack.c.b16 %v298, %v298
  %v315 = vpack.c.b16 %v299, %v299
  %v316 = vpack.c.b16 %v300, %v300
  %v317 = vpack.c.b16 %v301, %v301
  %v318 = vpack.c.b16 %v302, %v302
  %v319 = vpack.c.b16 %v303, %v303
  %v320 = vpack.c.b16 %v304, %v304
  %v321 = vpack.c.b16 %v305, %v305
  %v322 = vpack.c.b16 %v306, %v306
  %v323 = vpack.c.b16 %v307, %v307
  %v324 = vpack.c.b16 %v308, %v308
  %v325 = vpack.c.b16 %v309, %v309
  %v598 = vunpack.c.l.b16 %v23
  %v599 = vunpack.c.l.b16 %v24
  %v600 = vunpack.c.l.b16 %v25
  %v601 = vunpack.c.l.b16 %v26
  %v602 = vunpack.c.l.b16 %v27
  %v603 = vunpack.c.l.b16 %v28
  %v604 = vunpack.c.l.b16 %v29
  %v605 = vunpack.c.l.b16 %v30
  %v606 = vunpack.c.l.b16 %v31
  %v607 = vunpack.c.l.b16 %v32
  %v608 = vunpack.c.l.b16 %v33
  %v609 = vunpack.c.l.b16 %v34
  %v610 = vunpack.c.l.b16 %v35
  %v611 = vunpack.c.l.b16 %v36
  %v612 = vunpack.c.l.b16 %v37
  %v613 = vunpack.c.l.b16 %v38
  %v614 = vunpack.c.l.b16 %v39
  %v615 = vunpack.c.l.b16 %v40
  %v616 = vunpack.c.l.b16 %v41
  %v617 = vunpack.c.l.b16 %v42
  %v618 = vunpack.c.l.b16 %v43
  %v619 = vunpack.c.l.b16 %v44
  %v620 = vunpack.c.l.b16 %v45
  %v621 = vunpack.c.l.b16 %v46
  %v622 = vunpack.c.l.b16 %v47
  %v623 = vunpack.c.l.b16 %v48
  %v624 = vunpack.c.l.b16 %v49
  %v625 = vunpack.c.l.b16 %v50
  %v626 = vunpack.c.l.b16 %v51
  %v627 = vunpack.c.l.b16 %v52
  %v628 = vunpack.c.l.b16 %v53
  %v629 = vunpack.c.l.b16 %v54
  %v630 = vunpack.c.l.b16 %v55
  %v631 = vunpack.c.l.b16 %v56
  %v632 = vunpack.c.l.b16 %v57
  %v633 = vunpack.c.l.b16 %v58
  %v634 = vunpack.c.l.b16 %v59
  %v635 = vunpack.c.l.b16 %v60
  %v636 = vunpack.c.l.b16 %v61
  %v637 = vunpack.c.l.b16 %v62
  %v638 = vunpack.c.l.b16 %v63
  %v639 = vunpack.c.l.b16 %v64
  %v640 = vunpack.c.l.b16 %v65
  %v641 = vunpack.c.l.b16 %v66
  %v642 = vunpack.c.l.b16 %v67
  %v643 = vunpack.c.l.b16 %v68
  %v644 = vunpack.c.l.b16 %v69
  %v645 = vunpack.c.l.b16 %v70
  %v646 = vunpack.c.l.b16 %v71
  %v647 = vunpack.c.l.b16 %v72
  %v648 = vunpack.c.l.b16 %v73
  %v649 = vunpack.c.l.b16 %v74
  %v650 = vunpack.c.l.b16 %v75
  %v651 = vunpack.c.l.b16 %v76
  %v652 = vunpack.c.l.b16 %v77
  %v653 = vunpack.c.l.b16 %v78
  %v654 = vunpack.c.l.b16 %v79
  %v655 = vunpack.c.l.b16 %v80
  %v656 = vunpack.c.l.b16 %v81
  %v657 = vunpack.c.l.b16 %v82
  %v658 = vunpack.c.l.b16 %v83
  %v659 = vunpack.c.l.b16 %v84
  %v660 = vunpack.c.l.b16 %v85
  %v661 = vunpack.c.l.b16 %v86
  %v662 = vunpack.c.l.b16 %v87
  %v663 = vunpack.c.l.b16 %v88
  %v664 = vunpack.c.l.b16 %v89
  %v665 = vunpack.c.l.b16 %v90
  %v666 = vunpack.c.l.b16 %v91
  %v667 = vunpack.c.l.b16 %v92
  %v668 = vunpack.c.l.b16 %v93
  %v669 = vunpack.c.l.b16 %v94
  %v670 = vunpack.c.l.b16 %v95
  %v671 = vunpack.c.l.b16 %v96
  %v672 = vunpack.c.l.b16 %v97
  %v673 = vunpack.c.l.b16 %v98
  %v674 = vunpack.c.l.b16 %v99
  %v675 = vunpack.c.l.b16 %v100
  %v676 = vunpack.c.l.b16 %v101
  %v677 = vunpack.c.l.b16 %v102
  %v678 = vunpack.c.l.b16 %v103
  %v679 = vunpack.c.l.b16 %v104
  %v680 = vunpack.c.l.b16 %v105
  %v681 = vunpack.c.l.b16 %v106
  %v682 = vunpack.c.l.b16 %v107
  %v683 = vunpack.c.l.b16 %v108
  %v684 = vunpack.c.l.b16 %v109
  %v685 = vunpack.c.l.b16 %v110
  %v686 = vunpack.c.l.b16 %v111
  %v687 = vunpack.c.l.b16 %v112
  %v688 = vunpack.c.l.b16 %v113
  %v689 = vunpack.c.l.b16 %v114
  %v690 = vunpack.c.l.b16 %v115
  %v691 = vunpack.c.l.b16 %v116
  %v692 = vunpack.c.l.b16 %v117
  %v693 = vunpack.c.l.b16 %v118
  %v694 = vunpack.c.l.b16 %v119
  %v695 = vunpack.c.l.b16 %v120
  %v696 = vunpack.c.l.b16 %v121
  %v697 = vunpack.c.l.b16 %v122
  %v698 = vunpack.c.l.b16 %v123
  %v699 = vunpack.c.l.b16 %v124
  %v700 = vunpack.c.l.b16 %v125
  %v701 = vunpack.c.l.b16 %v126
  %v702 = vunpack.c.l.b16 %v127
  %v703 = vunpack.c.l.b16 %v128
  %v704 = vunpack.c.l.b16 %v129
  %v705 = vunpack.c.l.b16 %v130
  %v706 = vunpack.c.l.b16 %v131
  %v707 = vunpack.c.l.b16 %v132
  %v708 = vunpack.c.l.b16 %v133
  %v709 = vunpack.c.l.b16 %v134
  %v710 = vunpack.c.l.b16 %v135
  %v711 = vunpack.c.l.b16 %v136
  %v712 = vunpack.c.l.b16 %v137
  %v713 = vunpack.c.l.b16 %v138
  %v714 = vunpack.c.l.b16 %v139
  %v715 = vunpack.c.l.b16 %v140
  %v716 = vunpack.c.l.b16 %v141
  %v717 = vunpack.c.l.b16 %v142
  %v718 = vunpack.c.l.b16 %v143
  %v719 = vunpack.c.l.b16 %v144
  %v720 = vunpack.c.l.b16 %v145
  %v721 = vunpack.c.l.b16 %v146
  %v722 = vunpack.c.l.b16 %v147
  %v723 = vunpack.c.l.b16 %v148
  %v724 = vunpack.c.l.b16 %v149
  %v725 = vunpack.c.l.b16 %v150
  %v726 = vunpack.c.l.b16 %v151
  %v727 = vunpack.c.l.b16 %v152
  %v728 = vunpack.c.l.b16 %v153
  %v729 = vunpack.c.l.b16 %v154
  %v730 = vunpack.c.l.b16 %v155
  %v731 = vunpack.c.l.b16 %v156
  %v732 = vunpack.c.l.b16 %v157
  %v733 = vunpack.c.l.b16 %v158
  %v734 = vunpack.c.l.b16 %v159
  %v735 = vunpack.c.l.b16 %v160
  %v736 = vunpack.c.l.b16 %v161
  %v737 = vunpack.c.l.b16 %v162
  %v738 = vunpack.c.l.b16 %v163
  %v739 = vunpack.c.l.b16 %v164
  %v740 = vunpack.c.l.b16 %v165
  %v741 = vunpack.c.l.b16 %v166
  %v742 = vunpack.c.l.b16 %v167
  %v743 = vunpack.c.l.b16 %v168
  %v744 = vunpack.c.l.b16 %v169
  %v745 = vunpack.c.l.b16 %v170
  %v746 = vunpack.c.l.b16 %v171
  %v747 = vunpack.c.l.b16 %v172
  %v748 = vunpack.c.l.b16 %v173
  %v749 = vunpack.c.l.b16 %v174
  %v750 = vunpack.c.l.b16 %v175
  %v751 = vunpack.c.l.b16 %v176
  %v752 = vunpack.c.l.b16 %v177
  %v753 = vunpack.c.l.b16 %v178
  %v754 = vunpack.c.l.b16 %v179
  %v755 = vunpack.c.l.b16 %v180
  %v756 = vunpack.c.l.b16 %v181
  %v757 = vunpack.c.l.b16 %v182
  %v758 = vunpack.c.l.b16 %v183
  %v759 = vunpack.c.l.b16 %v184
  %v760 = vunpack.c.l.b16 %v185
  %v761 = vunpack.c.l.b16 %v186
  %v762 = vunpack.c.l.b16 %v187
  %v763 = vunpack.c.l.b16 %v188
  %v764 = vunpack.c.l.b16 %v189
  %v765 = vunpack.c.l.b16 %v190
  %v766 = vunpack.c.l.b16 %v191
  %v767 = vunpack.c.l.b16 %v192
  %v768 = vunpack.c.l.b16 %v193
  %v769 = vunpack.c.l.b16 %v194
  %v770 = vunpack.c.l.b16 %v195
  %v771 = vunpack.c.l.b16 %v196
  %v772 = vunpack.c.l.b16 %v197
  %v773 = vunpack.c.l.b16 %v198
  %v774 = vunpack.c.l.b16 %v199
  %v775 = vunpack.c.l.b16 %v200
  %v776 = vunpack.c.l.b16 %v201
  %v777 = vunpack.c.l.b16 %v202
  %v778 = vunpack.c.l.b16 %v203
  %v779 = vunpack.c.l.b16 %v204
  %v780 = vunpack.c.l.b16 %v205
  %v781 = vunpack.c.l.b16 %v206
  %v782 = vunpack.c.l.b16 %v207
  %v783 = vunpack.c.l.b16 %v208
  %v784 = vunpack.c.l.b16 %v209
  %v785 = vunpack.c.l.b16 %v210
  %v786 = vunpack.c.l.b16 %v211
  %v787 = vunpack.c.l.b16 %v212
  %v788 = vunpack.c.l.b16 %v213
  %v789 = vunpack.c.l.b16 %v214
  %v790 = vunpack.c.l.b16 %v215
  %v791 = vunpack.c.l.b16 %v216
  %v792 = vunpack.c.l.b16 %v217
  %v793 = vunpack.c.l.b16 %v218
  %v794 = vunpack.c.l.b16 %v219
  %v795 = vunpack.c.l.b16 %v220
  %v796 = vunpack.c.l.b16 %v221
  %v797 = vunpack.c.l.b16 %v222
  %v798 = vunpack.c.l.b16 %v223
  %v799 = vunpack.c.l.b16 %v224
  %v800 = vunpack.c.l.b16 %v225
  %v801 = vunpack.c.l.b16 %v226
  %v802 = vunpack.c.l.b16 %v227
  %v803 = vunpack.c.l.b16 %v228
  %v804 = vunpack.c.l.b16 %v229
  %v805 = vunpack.c.l.b16 %v230
  %v806 = vunpack.c.l.b16 %v231
  %v807 = vunpack.c.l.b16 %v232
  %v808 = vunpack.c.l.b16 %v233
  %v809 = vunpack.c.l.b16 %v234
  %v810 = vunpack.c.l.b16 %v235
  %v811 = vunpack.c.l.b16 %v236
  %v812 = vunpack.c.l.b16 %v237
  %v813 = vunpack.c.l.b16 %v238
  %v814 = vunpack.c.l.b16 %v239
  %v815 = vunpack.c.l.b16 %v240
  %v816 = vunpack.c.l.b16 %v241
  %v817 = vunpack.c.l.b16 %v242
  %v818 = vunpack.c.l.b16 %v243
  %v819 = vunpack.c.l.b16 %v244
  %v820 = vunpack.c.l.b16 %v245
  %v821 = vunpack.c.l.b16 %v246
  %v822 = vunpack.c.l.b16 %v247
  %v823 = vunpack.c.l.b16 %v248
  %v824 = vunpack.c.l.b16 %v249
  %v825 = vunpack.c.l.b16 %v250
  %v826 = vunpack.c.l.b16 %v251
  %v827 = vunpack.c.l.b16 %v252
  %v828 = vunpack.c.l.b16 %v253
  %v829 = vunpack.c.l.b16 %v254
  %v830 = vunpack.c.l.b16 %v255
  %v831 = vunpack.c.l.b16 %v256
  %v832 = vunpack.c.l.b16 %v257
  %v833 = vunpack.c.l.b16 %v258
  %v834 = vunpack.c.l.b16 %v259
  %v835 = vunpack.c.l.b16 %v260
  %v836 = vunpack.c.l.b16 %v261
  %v837 = vunpack.c.l.b16 %v262
  %v838 = vunpack.c.l.b16 %v263
  %v839 = vunpack.c.l.b16 %v264
  %v840 = vunpack.c.l.b16 %v265
  %v841 = vunpack.c.l.b16 %v266
  %v842 = vunpack.c.l.b16 %v267
  %v843 = vunpack.c.l.b16 %v268
  %v844 = vunpack.c.l.b16 %v269
  %v845 = vunpack.c.l.b16 %v270
  %v846 = vunpack.c.l.b16 %v271
  %v847 = vunpack.c.l.b16 %v272
  %v848 = vunpack.c.l.b16 %v273
  %v849 = vunpack.c.l.b16 %v274
  %v850 = vunpack.c.l.b16 %v275
  %v851 = vunpack.c.l.b16 %v276
  %v852 = vunpack.c.l.b16 %v277
  %v853 = vunpack.c.l.b16 %v278
  %v854 = vpack.c.b16 %v599, %v598
  %v855 = vpack.c.b16 %v601, %v600
  %v856 = vpack.c.b16 %v603, %v602
  %v857 = vpack.c.b16 %v605, %v604
  %v858 = vpack.c.b16 %v607, %v606
  %v859 = vpack.c.b16 %v609, %v608
  %v860 = vpack.c.b16 %v611, %v610
  %v861 = vpack.c.b16 %v613, %v612
  %v862 = vpack.c.b16 %v615, %v614
  %v863 = vpack.c.b16 %v617, %v616
  %v864 = vpack.c.b16 %v619, %v618
  %v865 = vpack.c.b16 %v621, %v620
  %v866 = vpack.c.b16 %v623, %v622
  %v867 = vpack.c.b16 %v625, %v624
  %v868 = vpack.c.b16 %v627, %v626
  %v869 = vpack.c.b16 %v629, %v628
  %v870 = vpack.c.b16 %v631, %v630
  %v871 = vpack.c.b16 %v633, %v632
  %v872 = vpack.c.b16 %v635, %v634
  %v873 = vpack.c.b16 %v637, %v636
  %v874 = vpack.c.b16 %v639, %v638
  %v875 = vpack.c.b16 %v641, %v640
  %v876 = vpack.c.b16 %v643, %v642
  %v877 = vpack.c.b16 %v645, %v644
  %v878 = vpack.c.b16 %v647, %v646
  %v879 = vpack.c.b16 %v649, %v648
  %v880 = vpack.c.b16 %v651, %v650
  %v881 = vpack.c.b16 %v653, %v652
  %v882 = vpack.c.b16 %v655, %v654
  %v883 = vpack.c.b16 %v657, %v656
  %v884 = vpack.c.b16 %v659, %v658
  %v885 = vpack.c.b16 %v661, %v660
  %v886 = vpack.c.b16 %v663, %v662
  %v887 = vpack.c.b16 %v665, %v664
  %v888 = vpack.c.b16 %v667, %v666
  %v889 = vpack.c.b16 %v669, %v668
  %v890 = vpack.c.b16 %v671, %v670
  %v891 = vpack.c.b16 %v673, %v672
  %v892 = vpack.c.b16 %v675, %v674
  %v893 = vpack.c.b16 %v677, %v676
  %v894 = vpack.c.b16 %v679, %v678
  %v895 = vpack.c.b16 %v681, %v680
  %v896 = vpack.c.b16 %v683, %v682
  %v897 = vpack.c.b16 %v685, %v684
  %v898 = vpack.c.b16 %v687, %v686
  %v899 = vpack.c.b16 %v689, %v688
  %v900 = vpack.c.b16 %v691, %v690
  %v901 = vpack.c.b16 %v693, %v692
  %v902 = vpack.c.b16 %v695, %v694
  %v903 = vpack.c.b16 %v697, %v696
  %v904 = vpack.c.b16 %v699, %v698
  %v905 = vpack.c.b16 %v701, %v700
  %v906 = vpack.c.b16 %v703, %v702
  %v907 = vpack.c.b16 %v705, %v704
  %v908 = vpack.c.b16 %v707, %v706
  %v909 = vpack.c.b16 %v709, %v708
  %v910 = vpack.c.b16 %v711, %v710
  %v911 = vpack.c.b16 %v713, %v712
  %v912 = vpack.c.b16 %v715, %v714
  %v913 = vpack.c.b16 %v717, %v716
  %v914 = vpack.c.b16 %v719, %v718
  %v915 = vpack.c.b16 %v721, %v720
  %v916 = vpack.c.b16 %v723, %v722
  %v917 = vpack.c.b16 %v725, %v724
  %v918 = vpack.c.b16 %v727, %v726
  %v919 = vpack.c.b16 %v729, %v728
  %v920 = vpack.c.b16 %v731, %v730
  %v921 = vpack.c.b16 %v733, %v732
  %v922 = vpack.c.b16 %v735, %v734
  %v923 = vpack.c.b16 %v737, %v736
  %v924 = vpack.c.b16 %v739, %v738
  %v925 = vpack.c.b16 %v741, %v740
  %v926 = vpack.c.b16 %v743, %v742
  %v927 = vpack.c.b16 %v745, %v744
  %v928 = vpack.c.b16 %v747, %v746
  %v929 = vpack.c.b16 %v749, %v748
  %v930 = vpack.c.b16 %v751, %v750
  %v931 = vpack.c.b16 %v753, %v752
  %v932 = vpack.c.b16 %v755, %v754
  %v933 = vpack.c.b16 %v757, %v756
  %v934 = vpack.c.b16 %v759, %v758
  %v935 = vpack.c.b16 %v761, %v760
  %v936 = vpack.c.b16 %v763, %v762
  %v937 = vpack.c.b16 %v765, %v764
  %v938 = vpack.c.b16 %v767, %v766
  %v939 = vpack.c.b16 %v769, %v768
  %v940 = vpack.c.b16 %v771, %v770
  %v941 = vpack.c.b16 %v773, %v772
  %v942 = vpack.c.b16 %v775, %v774
  %v943 = vpack.c.b16 %v777, %v776
  %v944 = vpack.c.b16 %v779, %v778
  %v945 = vpack.c.b16 %v781, %v780
  %v946 = vpack.c.b16 %v783, %v782
  %v947 = vpack.c.b16 %v785, %v784
  %v948 = vpack.c.b16 %v787, %v786
  %v949 = vpack.c.b16 %v789, %v788
  %v950 = vpack.c.b16 %v791, %v790
  %v951 = vpack.c.b16 %v793, %v792
  %v952 = vpack.c.b16 %v795, %v794
  %v953 = vpack.c.b16 %v797, %v796
  %v954 = vpack.c.b16 %v799, %v798
  %v955 = vpack.c.b16 %v801, %v800
  %v956 = vpack.c.b16 %v803, %v802
  %v957 = vpack.c.b16 %v805, %v804
  %v958 = vpack.c.b16 %v807, %v806
  %v959 = vpack.c.b16 %v809, %v808
  %v960 = vpack.c.b16 %v811, %v810
  %v961 = vpack.c.b16 %v813, %v812
  %v962 = vpack.c.b16 %v815, %v814
  %v963 = vpack.c.b16 %v817, %v816
  %v964 = vpack.c.b16 %v819, %v818
  %v965 = vpack.c.b16 %v821, %v820
  %v966 = vpack.c.b16 %v823, %v822
  %v967 = vpack.c.b16 %v825, %v824
  %v968 = vpack.c.b16 %v827, %v826
  %v969 = vpack.c.b16 %v829, %v828
  %v970 = vpack.c.b16 %v831, %v830
  %v971 = vpack.c.b16 %v833, %v832
  %v972 = vpack.c.b16 %v835, %v834
  %v973 = vpack.c.b16 %v837, %v836
  %v974 = vpack.c.b16 %v839, %v838
  %v975 = vpack.c.b16 %v841, %v840
  %v976 = vpack.c.b16 %v843, %v842
  %v977 = vpack.c.b16 %v845, %v844
  %v978 = vpack.c.b16 %v847, %v846
  %v979 = vpack.c.b16 %v849, %v848
  %v980 = vpack.c.b16 %v851, %v850
  %v981 = vpack.c.b16 %v853, %v852
  %1110 = vmatprep.subr.bf16.mxu0 0
  %1111 = vmatpush1.bf16.msra.mxu0 %v854
  %1112 = vmatprep.subr.bf16.mxu0 0
  %1113 = vmatpush1.bf16.msra.mxu0 %v855
  %1114 = vmatprep.subr.bf16.mxu0 0
  %1115 = vmatpush1.bf16.msra.mxu0 %v856
  %1116 = vmatprep.subr.bf16.mxu0 0
  %1117 = vmatpush1.bf16.msra.mxu0 %v857
  %1118 = vmatprep.subr.bf16.mxu0 0
  %1119 = vmatpush1.bf16.msra.mxu0 %v858
  %1120 = vmatprep.subr.bf16.mxu0 0
  %1121 = vmatpush1.bf16.msra.mxu0 %v859
  %1122 = vmatprep.subr.bf16.mxu0 0
  %1123 = vmatpush1.bf16.msra.mxu0 %v860
  %1124 = vmatprep.subr.bf16.mxu0 0
  %1125 = vmatpush1.bf16.msra.mxu0 %v861
  %1126 = vmatprep.subr.bf16.mxu0 0
  %1127 = vmatpush1.bf16.msra.mxu0 %v862
  %1128 = vmatprep.subr.bf16.mxu0 0
  %1129 = vmatpush1.bf16.msra.mxu0 %v863
  %1130 = vmatprep.subr.bf16.mxu0 0
  %1131 = vmatpush1.bf16.msra.mxu0 %v864
  %1132 = vmatprep.subr.bf16.mxu0 0
  %1133 = vmatpush1.bf16.msra.mxu0 %v865
  %1134 = vmatprep.subr.bf16.mxu0 0
  %1135 = vmatpush1.bf16.msra.mxu0 %v866
  %1136 = vmatprep.subr.bf16.mxu0 0
  %1137 = vmatpush1.bf16.msra.mxu0 %v867
  %1138 = vmatprep.subr.bf16.mxu0 0
  %1139 = vmatpush1.bf16.msra.mxu0 %v868
  %1140 = vmatprep.subr.bf16.mxu0 0
  %1141 = vmatpush1.bf16.msra.mxu0 %v869
  %1142 = vmatprep.mubr.bf16.mxu0 %v311
  %1143 = vmatmul.mubr.bf16.gmra.mrb[0].mxu0 %v310
  %v1144 = vpop.f32.mrb[0].mxu0
  %v1145 = vadd.f32 %v284, %v1144
  %v1146 = vpop.f32.mrb[0].mxu0
  %v1147 = vpop.f32.mrb[0].mxu0
  %v1148 = vpop.f32.mrb[0].mxu0
  %1149 = vdwg.mxu0
  %1150 = vmatprep.subr.bf16.mxu0 0
  %1151 = vmatpush1.bf16.msra.mxu0 %v870
  %1152 = vmatprep.subr.bf16.mxu0 0
  %1153 = vmatpush1.bf16.msra.mxu0 %v871
  %1154 = vmatprep.subr.bf16.mxu0 0
  %1155 = vmatpush1.bf16.msra.mxu0 %v872
  %1156 = vmatprep.subr.bf16.mxu0 0
  %1157 = vmatpush1.bf16.msra.mxu0 %v873
  %1158 = vmatprep.subr.bf16.mxu0 0
  %1159 = vmatpush1.bf16.msra.mxu0 %v874
  %1160 = vmatprep.subr.bf16.mxu0 0
  %1161 = vmatpush1.bf16.msra.mxu0 %v875
  %1162 = vmatprep.subr.bf16.mxu0 0
  %1163 = vmatpush1.bf16.msra.mxu0 %v876
  %1164 = vmatprep.subr.bf16.mxu0 0
  %1165 = vmatpush1.bf16.msra.mxu0 %v877
  %1166 = vmatprep.subr.bf16.mxu0 0
  %1167 = vmatpush1.bf16.msra.mxu0 %v878
  %1168 = vmatprep.subr.bf16.mxu0 0
  %1169 = vmatpush1.bf16.msra.mxu0 %v879
  %1170 = vmatprep.subr.bf16.mxu0 0
  %1171 = vmatpush1.bf16.msra.mxu0 %v880
  %1172 = vmatprep.subr.bf16.mxu0 0
  %1173 = vmatpush1.bf16.msra.mxu0 %v881
  %1174 = vmatprep.subr.bf16.mxu0 0
  %1175 = vmatpush1.bf16.msra.mxu0 %v882
  %1176 = vmatprep.subr.bf16.mxu0 0
  %1177 = vmatpush1.bf16.msra.mxu0 %v883
  %1178 = vmatprep.subr.bf16.mxu0 0
  %1179 = vmatpush1.bf16.msra.mxu0 %v884
  %1180 = vmatprep.subr.bf16.mxu0 0
  %1181 = vmatpush1.bf16.msra.mxu0 %v885
  %1182 = vmatprep.mubr.bf16.mxu0 %v313
  %1183 = vmatmul.mubr.bf16.gmra.mrb[0].mxu0 %v312
  %v1184 = vpop.f32.mrb[0].mxu0
  %v1185 = vadd.f32 %v1145, %v1184
  %v1186 = vpop.f32.mrb[0].mxu0
  %v1187 = vpop.f32.mrb[0].mxu0
  %v1188 = vpop.f32.mrb[0].mxu0
  %1189 = vdwg.mxu0
  %1190 = vmatprep.subr.bf16.mxu0 0
  %1191 = vmatpush1.bf16.msra.mxu0 %v886
  %1192 = vmatprep.subr.bf16.mxu0 0
  %1193 = vmatpush1.bf16.msra.mxu0 %v887
  %1194 = vmatprep.subr.bf16.mxu0 0
  %1195 = vmatpush1.bf16.msra.mxu0 %v888
  %1196 = vmatprep.subr.bf16.mxu0 0
  %1197 = vmatpush1.bf16.msra.mxu0 %v889
  %1198 = vmatprep.subr.bf16.mxu0 0
  %1199 = vmatpush1.bf16.msra.mxu0 %v890
  %1200 = vmatprep.subr.bf16.mxu0 0
  %1201 = vmatpush1.bf16.msra.mxu0 %v891
  %1202 = vmatprep.subr.bf16.mxu0 0
  %1203 = vmatpush1.bf16.msra.mxu0 %v892
  %1204 = vmatprep.subr.bf16.mxu0 0
  %1205 = vmatpush1.bf16.msra.mxu0 %v893
  %1206 = vmatprep.subr.bf16.mxu0 0
  %1207 = vmatpush1.bf16.msra.mxu0 %v894
  %1208 = vmatprep.subr.bf16.mxu0 0
  %1209 = vmatpush1.bf16.msra.mxu0 %v895
  %1210 = vmatprep.subr.bf16.mxu0 0
  %1211 = vmatpush1.bf16.msra.mxu0 %v896
  %1212 = vmatprep.subr.bf16.mxu0 0
  %1213 = vmatpush1.bf16.msra.mxu0 %v897
  %1214 = vmatprep.subr.bf16.mxu0 0
  %1215 = vmatpush1.bf16.msra.mxu0 %v898
  %1216 = vmatprep.subr.bf16.mxu0 0
  %1217 = vmatpush1.bf16.msra.mxu0 %v899
  %1218 = vmatprep.subr.bf16.mxu0 0
  %1219 = vmatpush1.bf16.msra.mxu0 %v900
  %1220 = vmatprep.subr.bf16.mxu0 0
  %1221 = vmatpush1.bf16.msra.mxu0 %v901
  %1222 = vmatprep.mubr.bf16.mxu0 %v315
  %1223 = vmatmul.mubr.bf16.gmra.mrb[0].mxu0 %v314
  %v1224 = vpop.f32.mrb[0].mxu0
  %v1225 = vadd.f32 %v1185, %v1224
  %v1226 = vpop.f32.mrb[0].mxu0
  %v1227 = vpop.f32.mrb[0].mxu0
  %v1228 = vpop.f32.mrb[0].mxu0
  %1229 = vdwg.mxu0
  %1230 = vmatprep.subr.bf16.mxu0 0
  %1231 = vmatpush1.bf16.msra.mxu0 %v902
  %1232 = vmatprep.subr.bf16.mxu0 0
  %1233 = vmatpush1.bf16.msra.mxu0 %v903
  %1234 = vmatprep.subr.bf16.mxu0 0
  %1235 = vmatpush1.bf16.msra.mxu0 %v904
  %1236 = vmatprep.subr.bf16.mxu0 0
  %1237 = vmatpush1.bf16.msra.mxu0 %v905
  %1238 = vmatprep.subr.bf16.mxu0 0
  %1239 = vmatpush1.bf16.msra.mxu0 %v906
  %1240 = vmatprep.subr.bf16.mxu0 0
  %1241 = vmatpush1.bf16.msra.mxu0 %v907
  %1242 = vmatprep.subr.bf16.mxu0 0
  %1243 = vmatpush1.bf16.msra.mxu0 %v908
  %1244 = vmatprep.subr.bf16.mxu0 0
  %1245 = vmatpush1.bf16.msra.mxu0 %v909
  %1246 = vmatprep.subr.bf16.mxu0 0
  %1247 = vmatpush1.bf16.msra.mxu0 %v910
  %1248 = vmatprep.subr.bf16.mxu0 0
  %1249 = vmatpush1.bf16.msra.mxu0 %v911
  %1250 = vmatprep.subr.bf16.mxu0 0
  %1251 = vmatpush1.bf16.msra.mxu0 %v912
  %1252 = vmatprep.subr.bf16.mxu0 0
  %1253 = vmatpush1.bf16.msra.mxu0 %v913
  %1254 = vmatprep.subr.bf16.mxu0 0
  %1255 = vmatpush1.bf16.msra.mxu0 %v914
  %1256 = vmatprep.subr.bf16.mxu0 0
  %1257 = vmatpush1.bf16.msra.mxu0 %v915
  %1258 = vmatprep.subr.bf16.mxu0 0
  %1259 = vmatpush1.bf16.msra.mxu0 %v916
  %1260 = vmatprep.subr.bf16.mxu0 0
  %1261 = vmatpush1.bf16.msra.mxu0 %v917
  %1262 = vmatprep.mubr.bf16.mxu0 %v317
  %1263 = vmatmul.mubr.bf16.gmra.mrb[0].mxu0 %v316
  %v1264 = vpop.f32.mrb[0].mxu0
  %v1265 = vadd.f32 %v1225, %v1264
  %v1266 = vpop.f32.mrb[0].mxu0
  %v1267 = vpop.f32.mrb[0].mxu0
  %v1268 = vpop.f32.mrb[0].mxu0
  %1269 = vdwg.mxu0
  %1270 = vmatprep.subr.bf16.mxu0 0
  %1271 = vmatpush1.bf16.msra.mxu0 %v918
  %1272 = vmatprep.subr.bf16.mxu0 0
  %1273 = vmatpush1.bf16.msra.mxu0 %v919
  %1274 = vmatprep.subr.bf16.mxu0 0
  %1275 = vmatpush1.bf16.msra.mxu0 %v920
  %1276 = vmatprep.subr.bf16.mxu0 0
  %1277 = vmatpush1.bf16.msra.mxu0 %v921
  %1278 = vmatprep.subr.bf16.mxu0 0
  %1279 = vmatpush1.bf16.msra.mxu0 %v922
  %1280 = vmatprep.subr.bf16.mxu0 0
  %1281 = vmatpush1.bf16.msra.mxu0 %v923
  %1282 = vmatprep.subr.bf16.mxu0 0
  %1283 = vmatpush1.bf16.msra.mxu0 %v924
  %1284 = vmatprep.subr.bf16.mxu0 0
  %1285 = vmatpush1.bf16.msra.mxu0 %v925
  %1286 = vmatprep.subr.bf16.mxu0 0
  %1287 = vmatpush1.bf16.msra.mxu0 %v926
  %1288 = vmatprep.subr.bf16.mxu0 0
  %1289 = vmatpush1.bf16.msra.mxu0 %v927
  %1290 = vmatprep.subr.bf16.mxu0 0
  %1291 = vmatpush1.bf16.msra.mxu0 %v928
  %1292 = vmatprep.subr.bf16.mxu0 0
  %1293 = vmatpush1.bf16.msra.mxu0 %v929
  %1294 = vmatprep.subr.bf16.mxu0 0
  %1295 = vmatpush1.bf16.msra.mxu0 %v930
  %1296 = vmatprep.subr.bf16.mxu0 0
  %1297 = vmatpush1.bf16.msra.mxu0 %v931
  %1298 = vmatprep.subr.bf16.mxu0 0
  %1299 = vmatpush1.bf16.msra.mxu0 %v932
  %1300 = vmatprep.subr.bf16.mxu0 0
  %1301 = vmatpush1.bf16.msra.mxu0 %v933
  %1302 = vmatprep.mubr.bf16.mxu0 %v319
  %1303 = vmatmul.mubr.bf16.gmra.mrb[0].mxu0 %v318
  %v1304 = vpop.f32.mrb[0].mxu0
  %v1305 = vadd.f32 %v1265, %v1304
  %v1306 = vpop.f32.mrb[0].mxu0
  %v1307 = vpop.f32.mrb[0].mxu0
  %v1308 = vpop.f32.mrb[0].mxu0
  %1309 = vdwg.mxu0
  %1310 = vmatprep.subr.bf16.mxu0 0
  %1311 = vmatpush1.bf16.msra.mxu0 %v934
  %1312 = vmatprep.subr.bf16.mxu0 0
  %1313 = vmatpush1.bf16.msra.mxu0 %v935
  %1314 = vmatprep.subr.bf16.mxu0 0
  %1315 = vmatpush1.bf16.msra.mxu0 %v936
  %1316 = vmatprep.subr.bf16.mxu0 0
  %1317 = vmatpush1.bf16.msra.mxu0 %v937
  %1318 = vmatprep.subr.bf16.mxu0 0
  %1319 = vmatpush1.bf16.msra.mxu0 %v938
  %1320 = vmatprep.subr.bf16.mxu0 0
  %1321 = vmatpush1.bf16.msra.mxu0 %v939
  %1322 = vmatprep.subr.bf16.mxu0 0
  %1323 = vmatpush1.bf16.msra.mxu0 %v940
  %1324 = vmatprep.subr.bf16.mxu0 0
  %1325 = vmatpush1.bf16.msra.mxu0 %v941
  %1326 = vmatprep.subr.bf16.mxu0 0
  %1327 = vmatpush1.bf16.msra.mxu0 %v942
  %1328 = vmatprep.subr.bf16.mxu0 0
  %1329 = vmatpush1.bf16.msra.mxu0 %v943
  %1330 = vmatprep.subr.bf16.mxu0 0
  %1331 = vmatpush1.bf16.msra.mxu0 %v944
  %1332 = vmatprep.subr.bf16.mxu0 0
  %1333 = vmatpush1.bf16.msra.mxu0 %v945
  %1334 = vmatprep.subr.bf16.mxu0 0
  %1335 = vmatpush1.bf16.msra.mxu0 %v946
  %1336 = vmatprep.subr.bf16.mxu0 0
  %1337 = vmatpush1.bf16.msra.mxu0 %v947
  %1338 = vmatprep.subr.bf16.mxu0 0
  %1339 = vmatpush1.bf16.msra.mxu0 %v948
  %1340 = vmatprep.subr.bf16.mxu0 0
  %1341 = vmatpush1.bf16.msra.mxu0 %v949
  %1342 = vmatprep.mubr.bf16.mxu0 %v321
  %1343 = vmatmul.mubr.bf16.gmra.mrb[0].mxu0 %v320
  %v1344 = vpop.f32.mrb[0].mxu0
  %v1345 = vadd.f32 %v1305, %v1344
  %v1346 = vpop.f32.mrb[0].mxu0
  %v1347 = vpop.f32.mrb[0].mxu0
  %v1348 = vpop.f32.mrb[0].mxu0
  %1349 = vdwg.mxu0
  %1350 = vmatprep.subr.bf16.mxu0 0
  %1351 = vmatpush1.bf16.msra.mxu0 %v950
  %1352 = vmatprep.subr.bf16.mxu0 0
  %1353 = vmatpush1.bf16.msra.mxu0 %v951
  %1354 = vmatprep.subr.bf16.mxu0 0
  %1355 = vmatpush1.bf16.msra.mxu0 %v952
  %1356 = vmatprep.subr.bf16.mxu0 0
  %1357 = vmatpush1.bf16.msra.mxu0 %v953
  %1358 = vmatprep.subr.bf16.mxu0 0
  %1359 = vmatpush1.bf16.msra.mxu0 %v954
  %1360 = vmatprep.subr.bf16.mxu0 0
  %1361 = vmatpush1.bf16.msra.mxu0 %v955
  %1362 = vmatprep.subr.bf16.mxu0 0
  %1363 = vmatpush1.bf16.msra.mxu0 %v956
  %1364 = vmatprep.subr.bf16.mxu0 0
  %1365 = vmatpush1.bf16.msra.mxu0 %v957
  %1366 = vmatprep.subr.bf16.mxu0 0
  %1367 = vmatpush1.bf16.msra.mxu0 %v958
  %1368 = vmatprep.subr.bf16.mxu0 0
  %1369 = vmatpush1.bf16.msra.mxu0 %v959
  %1370 = vmatprep.subr.bf16.mxu0 0
  %1371 = vmatpush1.bf16.msra.mxu0 %v960
  %1372 = vmatprep.subr.bf16.mxu0 0
  %1373 = vmatpush1.bf16.msra.mxu0 %v961
  %1374 = vmatprep.subr.bf16.mxu0 0
  %1375 = vmatpush1.bf16.msra.mxu0 %v962
  %1376 = vmatprep.subr.bf16.mxu0 0
  %1377 = vmatpush1.bf16.msra.mxu0 %v963
  %1378 = vmatprep.subr.bf16.mxu0 0
  %1379 = vmatpush1.bf16.msra.mxu0 %v964
  %1380 = vmatprep.subr.bf16.mxu0 0
  %1381 = vmatpush1.bf16.msra.mxu0 %v965
  %1382 = vmatprep.mubr.bf16.mxu0 %v323
  %1383 = vmatmul.mubr.bf16.gmra.mrb[0].mxu0 %v322
  %v1384 = vpop.f32.mrb[0].mxu0
  %v1385 = vadd.f32 %v1345, %v1384
  %v1386 = vpop.f32.mrb[0].mxu0
  %v1387 = vpop.f32.mrb[0].mxu0
  %v1388 = vpop.f32.mrb[0].mxu0
  %1389 = vdwg.mxu0
  %1390 = vmatprep.subr.bf16.mxu0 0
  %1391 = vmatpush1.bf16.msra.mxu0 %v966
  %1392 = vmatprep.subr.bf16.mxu0 0
  %1393 = vmatpush1.bf16.msra.mxu0 %v967
  %1394 = vmatprep.subr.bf16.mxu0 0
  %1395 = vmatpush1.bf16.msra.mxu0 %v968
  %1396 = vmatprep.subr.bf16.mxu0 0
  %1397 = vmatpush1.bf16.msra.mxu0 %v969
  %1398 = vmatprep.subr.bf16.mxu0 0
  %1399 = vmatpush1.bf16.msra.mxu0 %v970
  %1400 = vmatprep.subr.bf16.mxu0 0
  %1401 = vmatpush1.bf16.msra.mxu0 %v971
  %1402 = vmatprep.subr.bf16.mxu0 0
  %1403 = vmatpush1.bf16.msra.mxu0 %v972
  %1404 = vmatprep.subr.bf16.mxu0 0
  %1405 = vmatpush1.bf16.msra.mxu0 %v973
  %1406 = vmatprep.subr.bf16.mxu0 0
  %1407 = vmatpush1.bf16.msra.mxu0 %v974
  %1408 = vmatprep.subr.bf16.mxu0 0
  %1409 = vmatpush1.bf16.msra.mxu0 %v975
  %1410 = vmatprep.subr.bf16.mxu0 0
  %1411 = vmatpush1.bf16.msra.mxu0 %v976
  %1412 = vmatprep.subr.bf16.mxu0 0
  %1413 = vmatpush1.bf16.msra.mxu0 %v977
  %1414 = vmatprep.subr.bf16.mxu0 0
  %1415 = vmatpush1.bf16.msra.mxu0 %v978
  %1416 = vmatprep.subr.bf16.mxu0 0
  %1417 = vmatpush1.bf16.msra.mxu0 %v979
  %1418 = vmatprep.subr.bf16.mxu0 0
  %1419 = vmatpush1.bf16.msra.mxu0 %v980
  %1420 = vmatprep.subr.bf16.mxu0 0
  %1421 = vmatpush1.bf16.msra.mxu0 %v981
  %1422 = vmatprep.mubr.bf16.mxu0 %v325
  %1423 = vmatmul.mubr.bf16.gmra.mrb[0].mxu0 %v324
  %v1424 = vpop.f32.mrb[0].mxu0
  %v1425 = vadd.f32 %v1385, %v1424
  %v1426 = vpop.f32.mrb[0].mxu0
  %v1427 = vpop.f32.mrb[0].mxu0
  %v1428 = vpop.f32.mrb[0].mxu0
  %1429 = vdwg.mxu0
  %1430 = vst [vmem:[%s3] sm:$0xff] %v1425
  // Predicated region
  $region14: #{encoder_cnn_forward.1} parent=0 // pred_check
    _
  $region15: #{encoder_cnn_forward.1} parent=0 // pred_check_branch
    %1432 = sbr.rel (0) target = $region17
  $region16: #{encoder_cnn_forward.1} parent=0 // pred_region
    _
  $region17: #{encoder_cnn_forward.1} parent=0 // pred_fallthru
    _
  // Predicated region
  $region18: #{encoder_cnn_forward.1} parent=0 // pred_check
    _
  $region19: #{encoder_cnn_forward.1} parent=0 // pred_check_branch
    %1434 = sbr.rel (0) target = $region21
  $region20: #{encoder_cnn_forward.1} parent=0 // pred_region
    _
  $region21: #{encoder_cnn_forward.1} parent=0 // pred_fallthru
    _

</llo_original>
